<compile_context>
chip_gen: v7x
topology: tpu7x:2x2x1
jax: 0.10.0
libtpu: 0.0.40
codegen_flags: <defaults>
</compile_context>

<pallas_src>
import functools

import jax
import jax.numpy as jnp
from jax.experimental import pallas as pl
from jax.experimental.pallas import tpu as pltpu

_EPS = 1e-12          # torch.nn.functional.normalize default eps
_EPS2 = _EPS * _EPS   # clamp applied to the SQUARED norm (equivalent)

_TM_CAP = 256         # sublane-aligned (8)
_TN_CAP = 512         # lane-aligned (128)
_TK_CAP = 1024        # lane-aligned (128)


def _round_up(v: int, m: int) -> int:
    return ((v + m - 1) // m) * m


def _pick_tile(dim: int, align: int, cap: int) -> int:
    """Largest multiple of `align`, <= cap, dividing round_up(dim, align)."""
    padded = _round_up(dim, align)
    t = min(cap, padded)
    t = (t // align) * align
    while padded % t:
        t -= align
    return t


# ---------------------------------------------------------------------------
# Kernel bodies
# ---------------------------------------------------------------------------
def _cossim_kernel_single_k(x_ref, p_ref, o_ref, *, mxu_dtype):
    """Whole feature axis resident: one MXU pass, no scratch accumulators."""
    x = x_ref[...]                       # (TM, Kp)
    p = p_ref[...]                       # (Kp, TN)
    x32 = x.astype(jnp.float32)
    p32 = p.astype(jnp.float32)

    # Squared norms: VPU mul + XLU reduce, hidden under the MXU matmul.
    inv_x = jax.lax.rsqrt(
        jnp.maximum(jnp.sum(x32 * x32, axis=1, keepdims=True), _EPS2))  # (TM, 1)
    inv_p = jax.lax.rsqrt(
        jnp.maximum(jnp.sum(p32 * p32, axis=0, keepdims=True), _EPS2))  # (1, TN)

    acc = jnp.dot(x.astype(mxu_dtype), p.astype(mxu_dtype),
                  preferred_element_type=jnp.float32)                   # (TM, TN)
    o_ref[...] = (acc * inv_x * inv_p).astype(o_ref.dtype)


def _cossim_kernel_tiled(x_ref, p_ref, o_ref, acc_ref, xss_ref, pss_ref, *,
                         mxu_dtype):
    """K-tiled path: accumulate raw dot + squared norms across K tiles."""
    k = pl.program_id(2)

    @pl.when(k == 0)
    def _init():
        acc_ref[...] = jnp.zeros_like(acc_ref)
        xss_ref[...] = jnp.zeros_like(xss_ref)
        pss_ref[...] = jnp.zeros_like(pss_ref)

    x = x_ref[...]                       # (TM, TK)
    p = p_ref[...]                       # (TK, TN)
    x32 = x.astype(jnp.float32)
    p32 = p.astype(jnp.float32)

    # Partial squared norms, accumulated across K tiles.
    xss_ref[...] += jnp.sum(x32 * x32, axis=1, keepdims=True)   # (TM, 1)
    pss_ref[...] += jnp.sum(p32 * p32, axis=0, keepdims=True)   # (1, TN)

    # Partial raw dot product on the MXU, f32 accumulation.
    acc_ref[...] += jnp.dot(x.astype(mxu_dtype), p.astype(mxu_dtype),
                            preferred_element_type=jnp.float32)

    @pl.when(k == pl.num_programs(2) - 1)
    def _finalize():
        inv_x = jax.lax.rsqrt(jnp.maximum(xss_ref[...], _EPS2))  # (TM, 1)
        inv_p = jax.lax.rsqrt(jnp.maximum(pss_ref[...], _EPS2))  # (1, TN)
        o_ref[...] = (acc_ref[...] * inv_x * inv_p).astype(o_ref.dtype)


# ---------------------------------------------------------------------------
# Wrapper
# ---------------------------------------------------------------------------
def cossim(
    x: jax.Array,
    projection: jax.Array,
    *,
    mxu_dtype=jnp.bfloat16,
    tm: int | None = None,
    tn: int | None = None,
    tk: int | None = None,
) -> jax.Array:
    """x: (B, nfeat); projection: (nfeat, nclass) -> logits (B, nclass) f32."""
    B, K = x.shape
    K2, N = projection.shape
    assert K == K2, (K, K2)

    # Tile sizes: M multiple of 8 (sublanes), N and K multiples of 128 (lanes /
    # MXU width) -> lane-dense output stores, no masked vst. Default picks are
    # divisors of the rounded extents (minimal zero padding).
    TM = tm if tm is not None else _pick_tile(B, 8, _TM_CAP)
    TN = tn if tn is not None else _pick_tile(N, 128, _TN_CAP)
    TK = tk if tk is not None else _pick_tile(K, 128, _TK_CAP)

    Mp, Np, Kp = _round_up(B, TM), _round_up(N, TN), _round_up(K, TK)

    # Zero-pad to the tiled extents (no-op for aligned shapes). Zero rows/cols
    # get a clamped norm and a zero raw dot, so they stay exactly zero and are
    # sliced off below.
    if (Mp, Kp) != (B, K):
        x = jnp.pad(x, ((0, Mp - B), (0, Kp - K)))
    if (Kp, Np) != (K, N):
        projection = jnp.pad(projection, ((0, Kp - K), (0, Np - N)))

    if Kp == TK:
        # Fast path: whole feature axis in one tile -> no K grid axis,
        # no accumulator scratch, direct store.
        grid = (Mp // TM, Np // TN)
        out = pl.pallas_call(
            functools.partial(_cossim_kernel_single_k, mxu_dtype=mxu_dtype),
            out_shape=jax.ShapeDtypeStruct((Mp, Np), jnp.float32),
            grid_spec=pltpu.PrefetchScalarGridSpec(
                num_scalar_prefetch=0,
                grid=grid,
                in_specs=[
                    pl.BlockSpec((TM, Kp), lambda i, j: (i, 0)),
                    pl.BlockSpec((Kp, TN), lambda i, j: (0, j)),
                ],
                out_specs=pl.BlockSpec((TM, TN), lambda i, j: (i, j)),
            ),
            compiler_params=pltpu.CompilerParams(
                dimension_semantics=("parallel", "parallel"),
            ),
        )(x, projection)
    else:
        grid = (Mp // TM, Np // TN, Kp // TK)
        out = pl.pallas_call(
            functools.partial(_cossim_kernel_tiled, mxu_dtype=mxu_dtype),
            out_shape=jax.ShapeDtypeStruct((Mp, Np), jnp.float32),
            grid_spec=pltpu.PrefetchScalarGridSpec(
                num_scalar_prefetch=0,
                grid=grid,
                in_specs=[
                    pl.BlockSpec((TM, TK), lambda i, j, k: (i, k)),
                    pl.BlockSpec((TK, TN), lambda i, j, k: (k, j)),
                ],
                out_specs=pl.BlockSpec((TM, TN), lambda i, j, k: (i, j)),
                scratch_shapes=[
                    pltpu.VMEM((TM, TN), jnp.float32),  # raw-dot accumulator
                    pltpu.VMEM((TM, 1), jnp.float32),   # sum(x^2) per row
                    pltpu.VMEM((1, TN), jnp.float32),   # sum(p^2) per column
                ],
            ),
            compiler_params=pltpu.CompilerParams(
                dimension_semantics=("parallel", "parallel", "arbitrary"),
            ),
        )(x, projection)

    return out[:B, :N]


def cossim_ref(x, projection):
    xn = x / jnp.maximum(jnp.linalg.norm(x, axis=1, keepdims=True), _EPS)
    pn = projection / jnp.maximum(
        jnp.linalg.norm(projection, axis=0, keepdims=True), _EPS
    )
    return xn @ pn


if __name__ == "__main__":
    key = jax.random.PRNGKey(0)

    # --- Small shapes consistent with the module: batch=8, nfeat=32, nclass=16
    #     (single-K fast path, grid (1, 1)).
    B, NFEAT, NCLASS = 8, 32, 16
    kx, kp, kx2, kp2 = jax.random.split(key, 4)
    x = jax.random.normal(kx, (B, NFEAT), dtype=jnp.float32)
    projection = jax.random.normal(kp, (NFEAT, NCLASS), dtype=jnp.float32)

    ref = cossim_ref(x, projection)

    # f32 MXU path: bit-for-bit-ish vs reference.
    logits_f32 = jax.block_until_ready(cossim(x, projection, mxu_dtype=jnp.float32))
    assert logits_f32.shape == (B, NCLASS)
    assert jnp.allclose(logits_f32, ref, atol=1e-5, rtol=1e-5), "f32 mismatch"

    # Default bf16-MXU path: looser tolerance (bf16 operands, f32 accumulation).
    logits_bf16 = jax.block_until_ready(cossim(x, projection))
    assert jnp.allclose(logits_bf16, ref, atol=5e-2, rtol=5e-2), "bf16 mismatch"

    # --- Larger case with padding (B=96, K=200->256, N=200->256).
    B2, NFEAT2, NCLASS2 = 96, 200, 200
    x2 = jax.random.normal(kx2, (B2, NFEAT2), dtype=jnp.float32)
    p2 = jax.random.normal(kp2, (NFEAT2, NCLASS2), dtype=jnp.float32)
    ref2 = cossim_ref(x2, p2)

    # Default tiles -> single-K fast path with padded extents.
    out2_fast = jax.block_until_ready(cossim(x2, p2, mxu_dtype=jnp.float32))
    assert out2_fast.shape == (B2, NCLASS2)
    assert jnp.allclose(out2_fast, ref2, atol=1e-4, rtol=1e-4), "fast-path mismatch"

    # Forced single-K multi-(i, j) grid: (2, 2).
    out2_ij = jax.block_until_ready(
        cossim(x2, p2, mxu_dtype=jnp.float32, tm=48, tn=128)
    )
    assert jnp.allclose(out2_ij, ref2, atol=1e-4, rtol=1e-4), "ij-grid mismatch"

    # Forced K-tiled path: grid (2, 2, 2) exercising pl.when init/finalize.
    out2_tiled = jax.block_until_ready(
        cossim(x2, p2, mxu_dtype=jnp.float32, tm=64, tn=128, tk=128)
    )
    assert jnp.allclose(out2_tiled, ref2, atol=1e-4, rtol=1e-4), "tiled f32 mismatch"

    out2_bf16 = jax.block_until_ready(cossim(x2, p2, tm=64, tn=128, tk=128))
    assert jnp.allclose(out2_bf16, ref2, atol=5e-2, rtol=5e-2), "tiled bf16 mismatch"

    print("KERNEL_OK")
</pallas_src>

<mosaic_0001>
module attributes {stable_mosaic.version = 11 : i64} {
  func.func @_cossim_kernel_single_k(%arg0: i32, %arg1: i32, %arg2: memref<8x128xf32, #tpu.memory_space<vmem>>, %arg3: memref<128x128xf32, #tpu.memory_space<vmem>>, %arg4: memref<8x128xf32, #tpu.memory_space<vmem>>) attributes {dimension_semantics = [#tpu.dimension_semantics<parallel>, #tpu.dimension_semantics<parallel>], iteration_bounds = array<i64: 1, 1>, scalar_prefetch = 0 : i64, scratch_operands = 0 : i64, tpu.core_type = #tpu.core_type<tc>, window_params = [{transform_indices = @transform_0, window_bounds = array<i64: 8, 128>}, {transform_indices = @transform_1, window_bounds = array<i64: 128, 128>}, {transform_indices = @transform_2, window_bounds = array<i64: 8, 128>}]} {
    %c0 = arith.constant 0 : index
    %c0_0 = arith.constant 0 : index
    %0 = vector.load %arg2[%c0, %c0_0] : memref<8x128xf32, #tpu.memory_space<vmem>>, vector<8x128xf32>
    %c0_1 = arith.constant 0 : index
    %c0_2 = arith.constant 0 : index
    %1 = vector.load %arg3[%c0_1, %c0_2] : memref<128x128xf32, #tpu.memory_space<vmem>>, vector<128x128xf32>
    %2 = arith.mulf %0, %0 : vector<8x128xf32>
    %cst = arith.constant dense<0.000000e+00> : vector<8xf32>
    %3 = vector.multi_reduction <add>, %2, %cst [1] : vector<8x128xf32> to vector<8xf32>
    %4 = vector.shape_cast %3 : vector<8xf32> to vector<8x1xf32>
    %cst_3 = arith.constant 1.000000e-24 : f32
    %5 = vector.broadcast %cst_3 : f32 to vector<8x1xf32>
    %6 = arith.maximumf %4, %5 : vector<8x1xf32>
    %7 = math.rsqrt %6 : vector<8x1xf32>
    %8 = arith.mulf %1, %1 : vector<128x128xf32>
    %cst_4 = arith.constant dense<0.000000e+00> : vector<128xf32>
    %9 = vector.multi_reduction <add>, %8, %cst_4 [0] : vector<128x128xf32> to vector<128xf32>
    %10 = vector.shape_cast %9 : vector<128xf32> to vector<1x128xf32>
    %cst_5 = arith.constant 1.000000e-24 : f32
    %11 = vector.broadcast %cst_5 : f32 to vector<1x128xf32>
    %12 = arith.maximumf %10, %11 : vector<1x128xf32>
    %13 = math.rsqrt %12 : vector<1x128xf32>
    %cst_6 = arith.constant dense<0.000000e+00> : vector<8x128xf32>
    %14 = tpu.matmul %0, %1, %cst_6 {dimension_numbers = #tpu.dot_dimension_numbers<[1], [0], [0], [1], [0, 0, 1, 1], [], []>} : vector<8x128xf32>, vector<128x128xf32>, vector<8x128xf32> -> vector<8x128xf32>
    %15 = vector.broadcast %7 : vector<8x1xf32> to vector<8x128xf32>
    %16 = arith.mulf %14, %15 : vector<8x128xf32>
    %17 = vector.broadcast %13 : vector<1x128xf32> to vector<8x128xf32>
    %18 = arith.mulf %16, %17 : vector<8x128xf32>
    %c0_7 = arith.constant 0 : index
    %c0_8 = arith.constant 0 : index
    %19 = vector.load %arg4[%c0_7, %c0_8] : memref<8x128xf32, #tpu.memory_space<vmem>>, vector<8x128xf32>
    tpu.vector_store %arg4[%c0_7, %c0_8], %18 {strides = array<i32>} : memref<8x128xf32, #tpu.memory_space<vmem>>, vector<8x128xf32>,
    return
  }
  func.func @transform_0(%arg0: i32, %arg1: i32) -> (i32, i32) {
    %c0_i32 = arith.constant 0 : i32
    %c0_i32_0 = arith.constant 0 : i32
    return %arg0, %c0_i32 : i32, i32
  }
  func.func @transform_1(%arg0: i32, %arg1: i32) -> (i32, i32) {
    %c0_i32 = arith.constant 0 : i32
    %c0_i32_0 = arith.constant 0 : i32
    return %c0_i32, %arg1 : i32, i32
  }
  func.func @transform_2(%arg0: i32, %arg1: i32) -> (i32, i32) {
    %c0_i32 = arith.constant 0 : i32
    return %arg0, %arg1 : i32, i32
  }
}

</mosaic_0001>

<llo_original>
// kernel: tpu_custom_call.1
$region0: #{tpu_custom_call.1}
  #allocation0 [shape = 'u32[]', space=smem, size = 0x4, offset = 0x4, fixed_abs, tag = 'smem constant byte address 0x4 - core index']
  #allocation1 [shape = 'u32[144,128]{1,0:T(1,128)}', space=vmem, size = 0x12000, scoped, tag = 'internal scratch']
  %s0 = inlined_call_operand.hbm [shape: f32[8,128], index: 0, kind: input, shape index: {}]
  %s1 = inlined_call_operand.hbm [shape: f32[128,128], index: 1, kind: input, shape index: {}]
  %s2 = inlined_call_operand.hbm [shape: f32[8,128], index: 2, kind: output, shape index: {}]
  %s3 = sld [smem:[#allocation0]]
  $region26: #{tpu_custom_call.1} parent=0
    _
  %s5 = ssub.s32 1, %s3
  %s6 = scalar_select 0, %s5, %s3
  $region1: #{tpu_custom_call.1} parent=0
    #allocation2 [shape = 'u8[4096]{0}', space=vmem, size = 0x1000, scoped, tag = 'input window, operand 0, single buffered']
    #allocation3 [shape = 's32[1]{0}', space=sflag, size = 0x4, scoped, tag = 'scoped memory for tpu_custom_call.1']
    #allocation4 [shape = 's32[1]{0}', space=sflag, size = 0x4, scoped, tag = 'scoped memory for tpu_custom_call.1']
    #allocation5 [shape = 'u8[65536]{0}', space=vmem, size = 0x10000, scoped, tag = 'input window, operand 1, single buffered']
    #allocation6 [shape = 's32[1]{0}', space=sflag, size = 0x4, scoped, tag = 'scoped memory for tpu_custom_call.1']
    #allocation7 [shape = 'u8[4096]{0}', space=vmem, size = 0x1000, scoped, tag = 'output window, operand 0, single buffered']
    %7 = vsyncpa [#allocation3], 0
    %8 = vsyncpa [#allocation6], 0
    %9 = vsyncpa [#allocation4], 0
    // Predicated region
    $region2: #{tpu_custom_call.1} parent=1 // pred_check
      _
    $region3: #{tpu_custom_call.1} parent=1 // pred_check_branch
      %11 = sbr.rel (0) target = $region5
    $region4: #{tpu_custom_call.1} parent=1 // pred_region
      %s13 = ssub.s32 128, 128
      %14 = vsyncadd [#allocation3], %s13
      %s16 = sshll.u32 [#allocation2], 4
      %s17 = int_to_ptr.vmem [resolvable:$true] %s16
      %19 = dma.hbm_to_vmem [thread:$0]  %s0, 128, %s17, [#allocation3]
    $region5: #{tpu_custom_call.1} parent=1 // pred_fallthru
      _
    // Predicated region
    $region6: #{tpu_custom_call.1} parent=1 // pred_check
      _
    $region7: #{tpu_custom_call.1} parent=1 // pred_check_branch
      %21 = sbr.rel (0) target = $region9
    $region8: #{tpu_custom_call.1} parent=1 // pred_region
      %s23 = ssub.s32 2048, 2048
      %24 = vsyncadd [#allocation6], %s23
      %s25 = sshll.u32 [#allocation5], 4
      %s26 = int_to_ptr.vmem [resolvable:$true] %s25
      %31 = dma.hbm_to_vmem [thread:$0]  %s1, 2048, %s26, [#allocation6], 128, 128, 8
    $region9: #{tpu_custom_call.1} parent=1 // pred_fallthru
      _
    // Predicated region
    $region10: #{tpu_custom_call.1} parent=1 // pred_check
      _
    $region11: #{tpu_custom_call.1} parent=1 // pred_check_branch
      %33 = sbr.rel (0) target = $region13
    $region12: #{tpu_custom_call.1} parent=1 // pred_region
      %34 = dma.done [#allocation3], 128
    $region13: #{tpu_custom_call.1} parent=1 // pred_fallthru
      _
    // Predicated region
    $region14: #{tpu_custom_call.1} parent=1 // pred_check
      _
    $region15: #{tpu_custom_call.1} parent=1 // pred_check_branch
      %36 = sbr.rel (0) target = $region17
    $region16: #{tpu_custom_call.1} parent=1 // pred_region
      %37 = dma.done [#allocation6], 2048
    $region17: #{tpu_custom_call.1} parent=1 // pred_fallthru
      _
    %v38 = vld [vmem:[#allocation2] sm:$0xff]
    %v39 = vld [vmem:[#allocation5] sm:$0xff]
    %v40 = vld [vmem:[#allocation5 + $0x8] sm:$0xff]
    %v41 = vld [vmem:[#allocation5 + $0x10] sm:$0xff]
    %v42 = vld [vmem:[#allocation5 + $0x18] sm:$0xff]
    %v43 = vld [vmem:[#allocation5 + $0x20] sm:$0xff]
    %v44 = vld [vmem:[#allocation5 + $0x28] sm:$0xff]
    %v45 = vld [vmem:[#allocation5 + $0x30] sm:$0xff]
    %v46 = vld [vmem:[#allocation5 + $0x38] sm:$0xff]
    %v47 = vld [vmem:[#allocation5 + $0x40] sm:$0xff]
    %v48 = vld [vmem:[#allocation5 + $0x48] sm:$0xff]
    %v49 = vld [vmem:[#allocation5 + $0x50] sm:$0xff]
    %v50 = vld [vmem:[#allocation5 + $0x58] sm:$0xff]
    %v51 = vld [vmem:[#allocation5 + $0x60] sm:$0xff]
    %v52 = vld [vmem:[#allocation5 + $0x68] sm:$0xff]
    %v53 = vld [vmem:[#allocation5 + $0x70] sm:$0xff]
    %v54 = vld [vmem:[#allocation5 + $0x78] sm:$0xff]
    %v55 = vmul.f32 %v38, %v38
    %56 = vadd.xlane.f32.xlu0 %v55
    %v57 = vpop.xlane.xlu0 %56
    %v58 = vmax.f32 %v57, 1e-24
    %v59 = vrsqrt.pop %v58
    %v60 = vmul.f32 %v39, %v39
    %v61 = vmul.f32 %v40, %v40
    %v62 = vmul.f32 %v41, %v41
    %v63 = vmul.f32 %v42, %v42
    %v64 = vmul.f32 %v43, %v43
    %v65 = vmul.f32 %v44, %v44
    %v66 = vmul.f32 %v45, %v45
    %v67 = vmul.f32 %v46, %v46
    %v68 = vmul.f32 %v47, %v47
    %v69 = vmul.f32 %v48, %v48
    %v70 = vmul.f32 %v49, %v49
    %v71 = vmul.f32 %v50, %v50
    %v72 = vmul.f32 %v51, %v51
    %v73 = vmul.f32 %v52, %v52
    %v74 = vmul.f32 %v53, %v53
    %v75 = vmul.f32 %v54, %v54
    %v76 = vadd.f32 %v60, %v61
    %v77 = vadd.f32 %v76, %v62
    %v78 = vadd.f32 %v77, %v63
    %v79 = vadd.f32 %v78, %v64
    %v80 = vadd.f32 %v79, %v65
    %v81 = vadd.f32 %v80, %v66
    %v82 = vadd.f32 %v81, %v67
    %v83 = vadd.f32 %v82, %v68
    %v84 = vadd.f32 %v83, %v69
    %v85 = vadd.f32 %v84, %v70
    %v86 = vadd.f32 %v85, %v71
    %v87 = vadd.f32 %v86, %v72
    %v88 = vadd.f32 %v87, %v73
    %v89 = vadd.f32 %v88, %v74
    %v90 = vadd.f32 %v89, %v75
    %v91 = vrot.slane %v90, 4
    %v92 = vadd.f32 %v90, %v91
    %v93 = vrot.slane %v92, 2
    %v94 = vadd.f32 %v92, %v93
    %v95 = vrot.slane %v94, 1
    %v96 = vadd.f32 %v94, %v95
    %v97 = vmax.f32 %v96, 1e-24
    %v98 = vrsqrt.pop %v97
    %99 = vmatprep.subr.mxu0 0.0
    %100 = vmatpush1.msra.mxu0 %v39
    %101 = vmatprep.subr.mxu0 0.0
    %102 = vmatpush1.msra.mxu0 %v40
    %103 = vmatprep.subr.mxu0 0.0
    %104 = vmatpush1.msra.mxu0 %v41
    %105 = vmatprep.subr.mxu0 0.0
    %106 = vmatpush1.msra.mxu0 %v42
    %107 = vmatprep.subr.mxu0 0.0
    %108 = vmatpush1.msra.mxu0 %v43
    %109 = vmatprep.subr.mxu0 0.0
    %110 = vmatpush1.msra.mxu0 %v44
    %111 = vmatprep.subr.mxu0 0.0
    %112 = vmatpush1.msra.mxu0 %v45
    %113 = vmatprep.subr.mxu0 0.0
    %114 = vmatpush1.msra.mxu0 %v46
    %115 = vmatprep.subr.mxu0 0.0
    %116 = vmatpush1.msra.mxu0 %v47
    %117 = vmatprep.subr.mxu0 0.0
    %118 = vmatpush1.msra.mxu0 %v48
    %119 = vmatprep.subr.mxu0 0.0
    %120 = vmatpush1.msra.mxu0 %v49
    %121 = vmatprep.subr.mxu0 0.0
    %122 = vmatpush1.msra.mxu0 %v50
    %123 = vmatprep.subr.mxu0 0.0
    %124 = vmatpush1.msra.mxu0 %v51
    %125 = vmatprep.subr.mxu0 0.0
    %126 = vmatpush1.msra.mxu0 %v52
    %127 = vmatprep.subr.mxu0 0.0
    %128 = vmatpush1.msra.mxu0 %v53
    %129 = vmatprep.subr.mxu0 0.0
    %130 = vmatpush1.msra.mxu0 %v54
    %131 = vmatprep.subr.mxu0 0.0
    %132 = vmatpush1.msra.mxu0 0.0
    %133 = vmatprep.subr.mxu0 0.0
    %134 = vmatpush1.msra.mxu0 0.0
    %135 = vmatprep.subr.mxu0 0.0
    %136 = vmatpush1.msra.mxu0 0.0
    %137 = vmatprep.subr.mxu0 0.0
    %138 = vmatpush1.msra.mxu0 0.0
    %139 = vmatprep.subr.mxu0 0.0
    %140 = vmatpush1.msra.mxu0 0.0
    %141 = vmatprep.subr.mxu0 0.0
    %142 = vmatpush1.msra.mxu0 0.0
    %143 = vmatprep.subr.mxu0 0.0
    %144 = vmatpush1.msra.mxu0 0.0
    %145 = vmatprep.subr.mxu0 0.0
    %146 = vmatpush1.msra.mxu0 0.0
    %147 = vmatprep.subr.mxu0 0.0
    %148 = vmatpush1.msra.mxu0 0.0
    %149 = vmatprep.subr.mxu0 0.0
    %150 = vmatpush1.msra.mxu0 0.0
    %151 = vmatprep.subr.mxu0 0.0
    %152 = vmatpush1.msra.mxu0 0.0
    %153 = vmatprep.subr.mxu0 0.0
    %154 = vmatpush1.msra.mxu0 0.0
    %155 = vmatprep.subr.mxu0 0.0
    %156 = vmatpush1.msra.mxu0 0.0
    %157 = vmatprep.subr.mxu0 0.0
    %158 = vmatpush1.msra.mxu0 0.0
    %159 = vmatprep.subr.mxu0 0.0
    %160 = vmatpush1.msra.mxu0 0.0
    %161 = vmatprep.subr.mxu0 0.0
    %162 = vmatpush1.msra.mxu0 0.0
    %163 = vmatprep.mubr.f32.mxu0 0.0
    %164 = vmatmul.mubr.f32.gmra.mrb[0].mxu0 %v38
    %v165 = vpop.f32.mrb[0].mxu0
    %v166 = vadd.f32 0.0, %v165
    %v167 = vpop.f32.mrb[0].mxu0
    %168 = vdwg.mxu0
    %v169 = vmul.f32 %v166, %v59
    %v170 = vmul.f32 %v169, %v98
    %171 = vst [vmem:[#allocation7] sm:$0xff] %v170
    // Predicated region
    $region18: #{tpu_custom_call.1} parent=1 // pred_check
      _
    $region19: #{tpu_custom_call.1} parent=1 // pred_check_branch
      %173 = sbr.rel (0) target = $region21
    $region20: #{tpu_custom_call.1} parent=1 // pred_region
      %s175 = ssub.s32 128, 128
      %176 = vsyncadd [#allocation4], %s175
      %s178 = sshll.u32 [#allocation7], 4
      %s179 = int_to_ptr.vmem [resolvable:$true] %s178
      %181 = dma.vmem_to_hbm [thread:$0]  %s179, 128, %s2, [#allocation4]
    $region21: #{tpu_custom_call.1} parent=1 // pred_fallthru
      _
    // Predicated region
    $region22: #{tpu_custom_call.1} parent=1 // pred_check
      _
    $region23: #{tpu_custom_call.1} parent=1 // pred_check_branch
      %183 = sbr.rel (0) target = $region25
    $region24: #{tpu_custom_call.1} parent=1 // pred_region
      %184 = dma.done [#allocation4], 128
    $region25: #{tpu_custom_call.1} parent=1 // pred_fallthru
      _
    %185 = vsyncpa [#allocation3], 1
    %186 = vsyncpa [#allocation6], 1
    %187 = vsyncpa [#allocation4], 1

</llo_original>
